<compile_context>
chip_gen: v5e
topology: v5e:2x2
jax: 0.10.0
libtpu: 0.0.40
codegen_flags: <defaults>
</compile_context>

<pallas_src>
import jax
import jax.numpy as jnp
from jax.experimental import pallas as pl
from jax.experimental.pallas import tpu as pltpu


def _embed_lookup_kernel(ids_ref, emb_ref, out_ref):
    # ids_ref: (TB, 1) int32 VMEM tile of task ids for this batch tile.
    # emb_ref: (num_tasks, embed_dim) VMEM-resident embedding table.
    # out_ref: (TB, embed_dim) VMEM output tile.
    ids = ids_ref[...]                                    # (TB, 1) int32
    table = emb_ref[...]                                  # (T, D)
    tb = ids.shape[0]
    num_tasks = table.shape[0]
    # One-hot select via VPU compare, gather via MXU matmul.
    task_iota = jax.lax.broadcasted_iota(jnp.int32, (tb, num_tasks), 1)
    onehot = (ids == task_iota).astype(table.dtype)       # (TB, T)
    out = jnp.dot(onehot, table, preferred_element_type=jnp.float32)
    out_ref[...] = out.astype(out_ref.dtype)


def stochastic_encoder_forward(
    task_id: jax.Array, embedding: jax.Array, *, batch_tile: int = 256
) -> jax.Array:
    """Pallas embedding lookup: returns embedding[task_id] of shape (B, embed_dim)."""
    assert task_id.ndim == 1, "flatten task_id to 1-D before calling"
    num_tasks, embed_dim = embedding.shape
    batch = task_id.shape[0]

    # Clamp ids so an out-of-range task id can never produce an OOB access.
    ids = jnp.clip(task_id.astype(jnp.int32), 0, num_tasks - 1)

    # Pad batch up to a multiple of 8 (sublane-dense tiles), then to a multiple
    # of the batch tile so the grid divides evenly.
    b_pad = max(8, -(-batch // 8) * 8)
    tb = min(batch_tile, b_pad)
    b_pad = -(-b_pad // tb) * tb
    ids_padded = jnp.zeros((b_pad, 1), jnp.int32).at[:batch, 0].set(ids)

    grid = (b_pad // tb,)
    itemsize = jnp.dtype(embedding.dtype).itemsize
    cost = pl.CostEstimate(
        flops=2 * b_pad * num_tasks * embed_dim,
        transcendentals=0,
        bytes_accessed=(
            num_tasks * embed_dim * itemsize        # table (fetched once)
            + b_pad * 4                             # ids
            + b_pad * embed_dim * itemsize          # output
        ),
    )

    out = pl.pallas_call(
        _embed_lookup_kernel,
        grid_spec=pl.GridSpec(
            grid=grid,
            in_specs=[
                # Per-tile batch of task ids.
                pl.BlockSpec((tb, 1), lambda i: (i, 0)),
                # Full embedding table, resident in VMEM (same block every step).
                pl.BlockSpec((num_tasks, embed_dim), lambda i: (0, 0)),
            ],
            out_specs=pl.BlockSpec((tb, embed_dim), lambda i: (i, 0)),
        ),
        out_shape=jax.ShapeDtypeStruct((b_pad, embed_dim), embedding.dtype),
        compiler_params=pltpu.CompilerParams(
            dimension_semantics=("parallel",),
        ),
        cost_estimate=cost,
    )(ids_padded, embedding)
    return out[:batch]


if __name__ == "__main__":
    # cfg.num_training_tasks = 8, cfg.embed_dim = 32  (small synthetic shapes)
    num_tasks = 8
    embed_dim = 32
    batch = 4

    key = jax.random.PRNGKey(0)
    k_emb, k_ids = jax.random.split(key)

    # Deterministic parameter init (nn.Embedding default ~ N(0, 1)).
    embedding = jax.random.normal(k_emb, (num_tasks, embed_dim), dtype=jnp.float32)
    task_id = jax.random.randint(k_ids, (batch,), 0, num_tasks, dtype=jnp.int32)

    out = stochastic_encoder_forward(task_id, embedding)
    out = jax.block_until_ready(out)

    # Reference check against plain JAX gather (same as torch nn.Embedding).
    ref = embedding[task_id]
    assert out.shape == (batch, embed_dim)
    assert jnp.allclose(out, ref), "Pallas embedding lookup mismatch"

    print("KERNEL_OK")
</pallas_src>

<mosaic_0001>
module attributes {stable_mosaic.version = 11 : i64} {
  func.func @_embed_lookup_kernel(%arg0: i32, %arg1: memref<8x1xi32, #tpu.memory_space<vmem>>, %arg2: memref<8x32xf32, #tpu.memory_space<vmem>>, %arg3: memref<8x32xf32, #tpu.memory_space<vmem>>) attributes {dimension_semantics = [#tpu.dimension_semantics<parallel>], iteration_bounds = array<i64: 1>, scalar_prefetch = 0 : i64, scratch_operands = 0 : i64, tpu.core_type = #tpu.core_type<tc>, window_params = [{transform_indices = @transform_0, window_bounds = array<i64: 8, 1>}, {pipeline_mode = #tpu.pipeline_mode<synchronous>, transform_indices = @transform_1, window_bounds = array<i64: 8, 32>}, {transform_indices = @transform_2, window_bounds = array<i64: 8, 32>}]} {
    %c0 = arith.constant 0 : index
    %c0_0 = arith.constant 0 : index
    %0 = vector.load %arg1[%c0, %c0_0] : memref<8x1xi32, #tpu.memory_space<vmem>>, vector<8x1xi32>
    %c0_1 = arith.constant 0 : index
    %c0_2 = arith.constant 0 : index
    %1 = vector.load %arg2[%c0_1, %c0_2] : memref<8x32xf32, #tpu.memory_space<vmem>>, vector<8x32xf32>
    %2 = tpu.iota {dimensions = array<i32: 1>} : vector<8x8xi32>
    %3 = vector.broadcast %0 : vector<8x1xi32> to vector<8x8xi32>
    %4 = arith.cmpi eq, %3, %2 : vector<8x8xi32>
    %5 = arith.extui %4 : vector<8x8xi1> to vector<8x8xi32>
    %6 = arith.sitofp %5 : vector<8x8xi32> to vector<8x8xf32>
    %cst = arith.constant dense<0.000000e+00> : vector<8x32xf32>
    %7 = tpu.matmul %6, %1, %cst {dimension_numbers = #tpu.dot_dimension_numbers<[1], [0], [0], [1], [0, 0, 1, 1], [], []>} : vector<8x8xf32>, vector<8x32xf32>, vector<8x32xf32> -> vector<8x32xf32>
    %c0_3 = arith.constant 0 : index
    %c0_4 = arith.constant 0 : index
    %8 = vector.load %arg3[%c0_3, %c0_4] : memref<8x32xf32, #tpu.memory_space<vmem>>, vector<8x32xf32>
    tpu.vector_store %arg3[%c0_3, %c0_4], %7 {strides = array<i32>} : memref<8x32xf32, #tpu.memory_space<vmem>>, vector<8x32xf32>,
    return
  }
  func.func @transform_0(%arg0: i32) -> (i32, i32) {
    %c0_i32 = arith.constant 0 : i32
    %c0_i32_0 = arith.constant 0 : i32
    return %arg0, %c0_i32 : i32, i32
  }
  func.func @transform_1(%arg0: i32) -> (i32, i32) {
    %c0_i32 = arith.constant 0 : i32
    %c0_i32_0 = arith.constant 0 : i32
    %c0_i32_1 = arith.constant 0 : i32
    return %c0_i32, %c0_i32_0 : i32, i32
  }
  func.func @transform_2(%arg0: i32) -> (i32, i32) {
    %c0_i32 = arith.constant 0 : i32
    %c0_i32_0 = arith.constant 0 : i32
    return %arg0, %c0_i32 : i32, i32
  }
}

</mosaic_0001>

<llo_original>
// kernel: tpu_custom_call.1
$region0: #{tpu_custom_call.1}
  #allocation0 [shape = 'u32[]', space=smem, size = 0x4, offset = 0x4, fixed_abs, tag = 'smem constant byte address 0x4 - core index']
  #allocation1 [shape = 'u32[72,128]{1,0:T(1,128)}', space=vmem, size = 0x9000, scoped, tag = 'internal scratch']
  %s0 = inlined_call_operand.vmem [shape: s32[8,1], index: 0, kind: input, shape index: {}]
  %s1 = inlined_call_operand.vmem [shape: f32[8,32], index: 1, kind: input, shape index: {}]
  %s2 = inlined_call_operand.hbm [shape: f32[8,32], index: 2, kind: output, shape index: {}]
  %s3 = sld [smem:[#allocation0]]
  $region18: #{tpu_custom_call.1} parent=0
    _
  %s5 = ssub.s32 1, %s3
  %s6 = scalar_select 0, %s5, %s3
  $region1: #{tpu_custom_call.1} parent=0
    #allocation2 [shape = 'u8[4096]{0}', space=vmem, size = 0x1000, scoped, tag = 'output window, operand 0, single buffered']
    #allocation3 [shape = 's32[1]{0}', space=sflag, size = 0x4, scoped, tag = 'scoped memory for tpu_custom_call.1']
    %7 = vsyncpa [#allocation3], 0
    // Predicated region
    $region2: #{tpu_custom_call.1} parent=1 // pred_check
      _
    $region3: #{tpu_custom_call.1} parent=1 // pred_check_branch
      %9 = sbr.rel (0) target = $region5
    $region4: #{tpu_custom_call.1} parent=1 // pred_region
      _
    $region5: #{tpu_custom_call.1} parent=1 // pred_fallthru
      _
    // Predicated region
    $region6: #{tpu_custom_call.1} parent=1 // pred_check
      _
    $region7: #{tpu_custom_call.1} parent=1 // pred_check_branch
      %11 = sbr.rel (0) target = $region9
    $region8: #{tpu_custom_call.1} parent=1 // pred_region
      _
    $region9: #{tpu_custom_call.1} parent=1 // pred_fallthru
      _
    %v12 = vld [vmem:[%s0] sm:$0xff]
    %v13 = vld [vmem:[%s1] sm:$0xff]
    %v14 = vlaneseq
    %v15 = vand.u32 %v14, 127
    %16 = vset.pattern.permute.xlu0 0
    %17 = vperm.xlu0 %16, %v12
    %v18 = vpop.permute.xlu0 %17
    %vm19 = vcmp.eq.s32.totalorder %v18, %v15
    %v20 = vsel %vm19, 1, 0
    %v21 = vcvt.s32.f32 %v20
    %vm22 = vcmask 64512
    %v24 = vsel %vm22, %v21, 0
    %26 = vmatpush.msra.mxu0 0.0
    %27 = vmatpush.msra.mxu0 0.0
    %28 = vmatpush.msra.mxu0 0.0
    %29 = vmatpush.msra.mxu0 0.0
    %30 = vmatpush.msra.mxu0 0.0
    %31 = vmatpush.msra.mxu0 0.0
    %32 = vmatpush.msra.mxu0 0.0
    %33 = vmatpush.msra.mxu0 0.0
    %34 = vmatpush.msra.mxu0 0.0
    %35 = vmatpush.msra.mxu0 0.0
    %36 = vmatpush.msra.mxu0 0.0
    %37 = vmatpush.msra.mxu0 0.0
    %38 = vmatpush.msra.mxu0 0.0
    %39 = vmatpush.msra.mxu0 0.0
    %40 = vmatpush.msra.mxu0 0.0
    %41 = vmatpush.msra.mxu0 %v13
    %42 = vmatmul.f32.gmra.mxu0 %v24
    %v43 = vpop.f32.mrf.mxu0
    %v44 = vadd.f32 0.0, %v43
    %45 = vdwg.mxu0
    %vm46 = vcmask 261120
    %47 = vst.msk [vmem:[#allocation2] sm:$0xff] %vm46, %v44
    // Predicated region
    $region10: #{tpu_custom_call.1} parent=1 // pred_check
      _
    $region11: #{tpu_custom_call.1} parent=1 // pred_check_branch
      %49 = sbr.rel (0) target = $region13
    $region12: #{tpu_custom_call.1} parent=1 // pred_region
      %51 = vsyncadd [#allocation3], 0
      %s53 = sshll.u32 [#allocation2], 4
      %s54 = int_to_ptr.vmem [resolvable:$true] %s53
      %s55 = sshll.u32 %s2, 4
      %s56 = int_to_ptr.hbm [resolvable:$true] %s55
      %58 = dma.vmem_to_hbm [thread:$0]  %s54, 128, %s56, [#allocation3]
    $region13: #{tpu_custom_call.1} parent=1 // pred_fallthru
      _
    // Predicated region
    $region14: #{tpu_custom_call.1} parent=1 // pred_check
      _
    $region15: #{tpu_custom_call.1} parent=1 // pred_check_branch
      %60 = sbr.rel (0) target = $region17
    $region16: #{tpu_custom_call.1} parent=1 // pred_region
      %62 = dma.done [#allocation3], 128
    $region17: #{tpu_custom_call.1} parent=1 // pred_fallthru
      _
    %63 = vsyncpa [#allocation3], 1

</llo_original>
